<compile_context>
chip_gen: v6e
topology: v6e:2x2x1
jax: 0.10.0
libtpu: 0.0.40
codegen_flags: <defaults>
</compile_context>

<pallas_src>
import functools

import jax
import jax.numpy as jnp
from jax.experimental import pallas as pl
from jax.experimental.pallas import tpu as pltpu

EPS = 1e-5


def fused_bn_conv_kernel(x_ref, w_ref, b_ref, gamma_ref, beta_ref, out_ref, *,
                         W, KH, KW):
    """Fused BN(train-mode batch stats over Cin) + VALID conv, batch folded into lanes.

    x_ref:     (Cin_pad, N*H*W)       channel-major input, batch+spatial in lanes
    w_ref:     (Cout, KH*KW*Cin_pad)  conv weight, tap-major then channel
    b_ref:     (Cout, 1)              conv bias
    gamma_ref: (Cin_pad, 1)           BN weight (0 on padded channels)
    beta_ref:  (Cin_pad, 1)           BN bias   (0 on padded channels)
    out_ref:   (Cout, N*H*W)          out[co, n*H*W + h*W + w] valid for h<OH, w<OW
    """
    x = x_ref[...]                                            # (Cp, NHW) f32
    Cp, NHW = x.shape
    KK = KH * KW

    # ---- BatchNorm batch statistics: per-channel lane-axis reduction -----------
    # (two-pass, centered variance to avoid E[x^2]-mean^2 cancellation)
    inv_n = 1.0 / float(NHW)
    mean = jnp.sum(x, axis=1, keepdims=True) * inv_n          # (Cp, 1)
    xc = x - mean
    var = jnp.sum(xc * xc, axis=1, keepdims=True) * inv_n     # (Cp, 1)
    scale = gamma_ref[...] * jax.lax.rsqrt(var + EPS)         # (Cp, 1)
    x_bn = xc * scale + beta_ref[...]                         # (Cp, NHW), VPU FMA

    # ---- Fused im2col: 9 lane-rotated views stacked along sublanes -------------
    # shifted_k[:, p] = x_bn[:, p + off_k].  For every valid output position
    # p = n*H*W + h*W + w (h < OH, w < OW) we have
    #   p + off_k = n*H*W + (h+di)*W + (w+dj) <= n*H*W + H*W - 1 < N*H*W,
    # so neither the roll wrap-around nor cross-sample bleed ever reaches a valid
    # position -- contamination lives only in the tail the wrapper slices off.
    taps = []
    for k in range(KK):                                       # static unroll (9 taps)
        off = (k // KW) * W + (k % KW)
        if off == 0:
            taps.append(x_bn)
        else:
            # roll(x, NHW - off) == left-shift by off lanes (jnp.roll semantics).
            taps.append(pltpu.roll(x_bn, shift=NHW - off, axis=1))
    xstack = jnp.concatenate(taps, axis=0)                    # (KK*Cp, NHW), 8-aligned

    # ---- One MXU matmul: (Cout, KK*Cp) x (KK*Cp, NHW) --------------------------
    out = jnp.dot(w_ref[...], xstack, preferred_element_type=jnp.float32)
    out_ref[...] = out + b_ref[...]                           # lane-dense store


@jax.jit
def bn_then_conv(x_nchw, conv_w, conv_b, bn_gamma, bn_beta):
    """Computes conv0(bn0(x)) with bn0 in training mode (batch statistics)."""
    Cout, Cin, KH, KW = conv_w.shape
    N, C, H, W = x_nchw.shape
    assert C == Cin
    OH, OW = H - KH + 1, W - KW + 1
    NHW = N * H * W
    CIN_PAD = 8   # pad channels to a full sublane group; padded channels contribute 0

    # Wrap/bleed safety: the farthest tap read for the last valid output stays
    # inside its own sample's H*W block.
    assert (OH - 1) * W + (OW - 1) + (KH - 1) * W + (KW - 1) < H * W

    # ---- Layout plumbing (tiny, wrapper-side) ----------------------------------
    x2 = jnp.transpose(x_nchw, (1, 0, 2, 3)).reshape(Cin, NHW)          # (Cin, NHW)
    x2 = jnp.pad(x2, ((0, CIN_PAD - Cin), (0, 0)))                      # (8, NHW)

    # (Cout,Cin,KH,KW) -> (Cout,KH,KW,Cin_pad) -> (Cout, KK*Cin_pad); column index
    # (kh*KW + kw)*Cin_pad + ci matches the kernel's tap-stack ordering.
    w2 = jnp.transpose(conv_w, (0, 2, 3, 1))
    w2 = jnp.pad(w2, ((0, 0), (0, 0), (0, 0), (0, CIN_PAD - Cin)))
    w2 = w2.reshape(Cout, KH * KW * CIN_PAD)                            # (8, 72)

    b2 = conv_b.reshape(Cout, 1)
    g2 = jnp.pad(bn_gamma, (0, CIN_PAD - Cin)).reshape(CIN_PAD, 1)
    be2 = jnp.pad(bn_beta, (0, CIN_PAD - Cin)).reshape(CIN_PAD, 1)

    vmem = pl.BlockSpec(memory_space=pltpu.MemorySpace.VMEM)
    kernel = functools.partial(fused_bn_conv_kernel, W=W, KH=KH, KW=KW)
    out_full = pl.pallas_call(
        kernel,
        out_shape=jax.ShapeDtypeStruct((Cout, NHW), jnp.float32),
        in_specs=[vmem, vmem, vmem, vmem, vmem],
        out_specs=vmem,
    )(x2, w2, b2, g2, be2)

    # Back to NCHW (tiny transpose), then drop the invalid tail rows/cols.
    out = jnp.transpose(out_full.reshape(Cout, N, H, W), (1, 0, 2, 3))
    return out[:, :, :OH, :OW]


def reference(x_nchw, conv_w, conv_b, bn_gamma, bn_beta):
    mean = jnp.mean(x_nchw, axis=(0, 2, 3), keepdims=True)
    var = jnp.mean((x_nchw - mean) ** 2, axis=(0, 2, 3), keepdims=True)
    xn = (x_nchw - mean) * jax.lax.rsqrt(var + EPS)
    xn = xn * bn_gamma.reshape(1, -1, 1, 1) + bn_beta.reshape(1, -1, 1, 1)
    out = jax.lax.conv_general_dilated(
        xn, conv_w, window_strides=(1, 1), padding="VALID",
        dimension_numbers=("NCHW", "OIHW", "NCHW"))
    return out + conv_b.reshape(1, -1, 1, 1)


if __name__ == "__main__":
    key = jax.random.PRNGKey(0)
    k_x, k_w, k_b = jax.random.split(key, 3)

    N, Cin, H, W = 2, 4, 16, 16
    Cout, KH, KW = 8, 3, 3

    x = jax.random.normal(k_x, (N, Cin, H, W), dtype=jnp.float32)

    # Deterministic parameter init (PyTorch-style uniform bounds).
    fan_in = Cin * KH * KW
    bound = 1.0 / (fan_in ** 0.5)
    conv_w = jax.random.uniform(k_w, (Cout, Cin, KH, KW), jnp.float32, -bound, bound)
    conv_b = jax.random.uniform(k_b, (Cout,), jnp.float32, -bound, bound)
    bn_gamma = jnp.ones((Cin,), jnp.float32)
    bn_beta = jnp.zeros((Cin,), jnp.float32)

    out = bn_then_conv(x, conv_w, conv_b, bn_gamma, bn_beta)
    out = jax.block_until_ready(out)

    ref = reference(x, conv_w, conv_b, bn_gamma, bn_beta)
    assert out.shape == (N, Cout, H - KH + 1, W - KW + 1), out.shape
    assert jnp.allclose(out, ref, atol=1e-4, rtol=1e-4), float(jnp.max(jnp.abs(out - ref)))

    print("KERNEL_OK")
</pallas_src>

<mosaic_0001>
module attributes {stable_mosaic.version = 11 : i64} {
  func.func @fused_bn_conv_kernel(%arg0: memref<8x512xf32, #tpu.memory_space<vmem>>, %arg1: memref<8x72xf32, #tpu.memory_space<vmem>>, %arg2: memref<8x1xf32, #tpu.memory_space<vmem>>, %arg3: memref<8x1xf32, #tpu.memory_space<vmem>>, %arg4: memref<8x1xf32, #tpu.memory_space<vmem>>, %arg5: memref<8x512xf32, #tpu.memory_space<vmem>>) attributes {dimension_semantics = [], scalar_prefetch = 0 : i64, scratch_operands = 0 : i64, tpu.core_type = #tpu.core_type<tc>} {
    %c0 = arith.constant 0 : index
    %c0_0 = arith.constant 0 : index
    %0 = vector.load %arg0[%c0, %c0_0] : memref<8x512xf32, #tpu.memory_space<vmem>>, vector<8x512xf32>
    %cst = arith.constant dense<0.000000e+00> : vector<8xf32>
    %1 = vector.multi_reduction <add>, %0, %cst [1] : vector<8x512xf32> to vector<8xf32>
    %2 = vector.shape_cast %1 : vector<8xf32> to vector<8x1xf32>
    %cst_1 = arith.constant 0.001953125 : f32
    %3 = vector.broadcast %cst_1 : f32 to vector<8x1xf32>
    %4 = arith.mulf %2, %3 : vector<8x1xf32>
    %5 = vector.broadcast %4 : vector<8x1xf32> to vector<8x512xf32>
    %6 = arith.subf %0, %5 : vector<8x512xf32>
    %7 = arith.mulf %6, %6 : vector<8x512xf32>
    %cst_2 = arith.constant dense<0.000000e+00> : vector<8xf32>
    %8 = vector.multi_reduction <add>, %7, %cst_2 [1] : vector<8x512xf32> to vector<8xf32>
    %9 = vector.shape_cast %8 : vector<8xf32> to vector<8x1xf32>
    %cst_3 = arith.constant 0.001953125 : f32
    %10 = vector.broadcast %cst_3 : f32 to vector<8x1xf32>
    %11 = arith.mulf %9, %10 : vector<8x1xf32>
    %c0_4 = arith.constant 0 : index
    %c0_5 = arith.constant 0 : index
    %12 = vector.load %arg3[%c0_4, %c0_5] : memref<8x1xf32, #tpu.memory_space<vmem>>, vector<8x1xf32>
    %cst_6 = arith.constant 9.99999974E-6 : f32
    %13 = vector.broadcast %cst_6 : f32 to vector<8x1xf32>
    %14 = arith.addf %11, %13 : vector<8x1xf32>
    %15 = math.rsqrt %14 : vector<8x1xf32>
    %16 = arith.mulf %12, %15 : vector<8x1xf32>
    %17 = vector.broadcast %16 : vector<8x1xf32> to vector<8x512xf32>
    %18 = arith.mulf %6, %17 : vector<8x512xf32>
    %c0_7 = arith.constant 0 : index
    %c0_8 = arith.constant 0 : index
    %19 = vector.load %arg4[%c0_7, %c0_8] : memref<8x1xf32, #tpu.memory_space<vmem>>, vector<8x1xf32>
    %20 = vector.broadcast %19 : vector<8x1xf32> to vector<8x512xf32>
    %21 = arith.addf %18, %20 : vector<8x512xf32>
    %c511_i32 = arith.constant 511 : i32
    %22 = tpu.dynamic_rotate %21 by %c511_i32 dim 1 : vector<8x512xf32>, i32 -> vector<8x512xf32>
    %c510_i32 = arith.constant 510 : i32
    %23 = tpu.dynamic_rotate %21 by %c510_i32 dim 1 : vector<8x512xf32>, i32 -> vector<8x512xf32>
    %c496_i32 = arith.constant 496 : i32
    %24 = tpu.dynamic_rotate %21 by %c496_i32 dim 1 : vector<8x512xf32>, i32 -> vector<8x512xf32>
    %c495_i32 = arith.constant 495 : i32
    %25 = tpu.dynamic_rotate %21 by %c495_i32 dim 1 : vector<8x512xf32>, i32 -> vector<8x512xf32>
    %c494_i32 = arith.constant 494 : i32
    %26 = tpu.dynamic_rotate %21 by %c494_i32 dim 1 : vector<8x512xf32>, i32 -> vector<8x512xf32>
    %c480_i32 = arith.constant 480 : i32
    %27 = tpu.dynamic_rotate %21 by %c480_i32 dim 1 : vector<8x512xf32>, i32 -> vector<8x512xf32>
    %c479_i32 = arith.constant 479 : i32
    %28 = tpu.dynamic_rotate %21 by %c479_i32 dim 1 : vector<8x512xf32>, i32 -> vector<8x512xf32>
    %c478_i32 = arith.constant 478 : i32
    %29 = tpu.dynamic_rotate %21 by %c478_i32 dim 1 : vector<8x512xf32>, i32 -> vector<8x512xf32>
    %30 = tpu.concatenate %21, %22, %23, %24, %25, %26, %27, %28, %29 in 0 : vector<8x512xf32>, vector<8x512xf32>, vector<8x512xf32>, vector<8x512xf32>, vector<8x512xf32>, vector<8x512xf32>, vector<8x512xf32>, vector<8x512xf32>, vector<8x512xf32> -> vector<72x512xf32>
    %c0_9 = arith.constant 0 : index
    %c0_10 = arith.constant 0 : index
    %31 = vector.load %arg1[%c0_9, %c0_10] : memref<8x72xf32, #tpu.memory_space<vmem>>, vector<8x72xf32>
    %cst_11 = arith.constant dense<0.000000e+00> : vector<8x512xf32>
    %32 = tpu.matmul %31, %30, %cst_11 {dimension_numbers = #tpu.dot_dimension_numbers<[1], [0], [0], [1], [0, 0, 1, 1], [], []>} : vector<8x72xf32>, vector<72x512xf32>, vector<8x512xf32> -> vector<8x512xf32>
    %c0_12 = arith.constant 0 : index
    %c0_13 = arith.constant 0 : index
    %33 = vector.load %arg2[%c0_12, %c0_13] : memref<8x1xf32, #tpu.memory_space<vmem>>, vector<8x1xf32>
    %34 = vector.broadcast %33 : vector<8x1xf32> to vector<8x512xf32>
    %35 = arith.addf %32, %34 : vector<8x512xf32>
    %c0_14 = arith.constant 0 : index
    %c0_15 = arith.constant 0 : index
    %36 = vector.load %arg5[%c0_14, %c0_15] : memref<8x512xf32, #tpu.memory_space<vmem>>, vector<8x512xf32>
    tpu.vector_store %arg5[%c0_14, %c0_15], %35 {strides = array<i32>} : memref<8x512xf32, #tpu.memory_space<vmem>>, vector<8x512xf32>,
    return
  }
}

</mosaic_0001>

<llo_original>
// kernel: bn_then_conv.1
$region0: #{bn_then_conv.1}
  #allocation0 [shape = 'u32[]', space=smem, size = 0x4, offset = 0x4, fixed_abs, tag = 'smem constant byte address 0x4 - core index']
  #allocation1 [shape = 'u32[144,128]{1,0:T(1,128)}', space=vmem, size = 0x12000, scoped, tag = 'internal scratch']
  %s0 = inlined_call_operand.vmem [shape: f32[8,512], index: 0, kind: input, shape index: {}]
  %s1 = inlined_call_operand.vmem [shape: f32[8,72], index: 1, kind: input, shape index: {}]
  %s2 = inlined_call_operand.vmem [shape: f32[8,1], index: 2, kind: input, shape index: {}]
  %s3 = inlined_call_operand.vmem [shape: f32[8,1], index: 3, kind: input, shape index: {}]
  %s4 = inlined_call_operand.vmem [shape: f32[8,1], index: 4, kind: input, shape index: {}]
  %s5 = inlined_call_operand.vmem [shape: f32[8,512], index: 5, kind: output, shape index: {}]
  %s6 = sld [smem:[#allocation0]]
  $region30: #{bn_then_conv.1} parent=0
    _
  %s8 = ssub.s32 1, %s6
  %s9 = scalar_select 0, %s8, %s6
  // Predicated region
  $region2: #{bn_then_conv.1} parent=0 // pred_check
    _
  $region3: #{bn_then_conv.1} parent=0 // pred_check_branch
    %11 = sbr.rel (0) target = $region5
  $region4: #{bn_then_conv.1} parent=0 // pred_region
    _
  $region5: #{bn_then_conv.1} parent=0 // pred_fallthru
    _
  // Predicated region
  $region6: #{bn_then_conv.1} parent=0 // pred_check
    _
  $region7: #{bn_then_conv.1} parent=0 // pred_check_branch
    %13 = sbr.rel (0) target = $region9
  $region8: #{bn_then_conv.1} parent=0 // pred_region
    _
  $region9: #{bn_then_conv.1} parent=0 // pred_fallthru
    _
  // Predicated region
  $region10: #{bn_then_conv.1} parent=0 // pred_check
    _
  $region11: #{bn_then_conv.1} parent=0 // pred_check_branch
    %15 = sbr.rel (0) target = $region13
  $region12: #{bn_then_conv.1} parent=0 // pred_region
    _
  $region13: #{bn_then_conv.1} parent=0 // pred_fallthru
    _
  // Predicated region
  $region14: #{bn_then_conv.1} parent=0 // pred_check
    _
  $region15: #{bn_then_conv.1} parent=0 // pred_check_branch
    %17 = sbr.rel (0) target = $region17
  $region16: #{bn_then_conv.1} parent=0 // pred_region
    _
  $region17: #{bn_then_conv.1} parent=0 // pred_fallthru
    _
  // Predicated region
  $region18: #{bn_then_conv.1} parent=0 // pred_check
    _
  $region19: #{bn_then_conv.1} parent=0 // pred_check_branch
    %19 = sbr.rel (0) target = $region21
  $region20: #{bn_then_conv.1} parent=0 // pred_region
    _
  $region21: #{bn_then_conv.1} parent=0 // pred_fallthru
    _
  %v20 = vld [vmem:[%s0] sm:$0xff]
  %v21 = vld [vmem:[%s0 + $0x8] sm:$0xff]
  %v22 = vld [vmem:[%s0 + $0x10] sm:$0xff]
  %v23 = vld [vmem:[%s0 + $0x18] sm:$0xff]
  %v24 = vadd.f32 %v20, %v21
  %v25 = vadd.f32 %v24, %v22
  %v26 = vadd.f32 %v25, %v23
  %27 = vadd.xlane.f32.xlu0 %v26
  %v28 = vpop.xlane.xlu0 %27
  %v29 = vmul.f32 %v28, 0.001953125
  %v30 = vsub.f32 %v20, %v29
  %v31 = vsub.f32 %v21, %v29
  %v32 = vsub.f32 %v22, %v29
  %v33 = vsub.f32 %v23, %v29
  %v34 = vmul.f32 %v30, %v30
  %v35 = vmul.f32 %v31, %v31
  %v36 = vmul.f32 %v32, %v32
  %v37 = vmul.f32 %v33, %v33
  %v38 = vadd.f32 %v34, %v35
  %v39 = vadd.f32 %v38, %v36
  %v40 = vadd.f32 %v39, %v37
  %41 = vadd.xlane.f32.xlu0 %v40
  %v42 = vpop.xlane.xlu0 %41
  %v43 = vmul.f32 %v42, 0.001953125
  %v44 = vld [vmem:[%s3] sm:$0xff]
  %v45 = vadd.f32 %v43, 1e-05
  %v46 = vrsqrt.pop %v45
  %v47 = vmul.f32 %v44, %v46
  %49 = vset.pattern.permute.xlu0 0
  %50 = vperm.xlu0 %49, %v47
  %v51 = vpop.permute.xlu0 %50
  %v53 = vmul.f32 %v30, %v51
  %v54 = vmul.f32 %v31, %v51
  %v55 = vmul.f32 %v32, %v51
  %v56 = vmul.f32 %v33, %v51
  %v57 = vld [vmem:[%s4] sm:$0xff]
  %59 = vset.pattern.permute.xlu0 0
  %60 = vperm.xlu0 %59, %v57
  %v61 = vpop.permute.xlu0 %60
  %v63 = vadd.f32 %v53, %v61
  %v64 = vadd.f32 %v54, %v61
  %v65 = vadd.f32 %v55, %v61
  %v66 = vadd.f32 %v56, %v61
  %67 = vrot.lane.b32.xlu0 %v63, 127
  %v68 = vpop.permute.xlu0 %67
  %69 = vrot.lane.b32.xlu0 %v64, 127
  %v70 = vpop.permute.xlu0 %69
  %71 = vrot.lane.b32.xlu0 %v65, 127
  %v72 = vpop.permute.xlu0 %71
  %73 = vrot.lane.b32.xlu0 %v66, 127
  %v74 = vpop.permute.xlu0 %73
  %v75 = vlaneseq
  %v76 = vand.u32 %v75, 127
  %vm77 = vcmp.lt.s32.totalorder %v76, 127
  %v78 = vsel %vm77, %v72, %v74
  %v79 = vsel %vm77, %v70, %v72
  %v80 = vsel %vm77, %v68, %v70
  %v81 = vsel %vm77, %v74, %v68
  %82 = vrot.lane.b32.xlu0 %v63, 126
  %v83 = vpop.permute.xlu0 %82
  %84 = vrot.lane.b32.xlu0 %v64, 126
  %v85 = vpop.permute.xlu0 %84
  %86 = vrot.lane.b32.xlu0 %v65, 126
  %v87 = vpop.permute.xlu0 %86
  %88 = vrot.lane.b32.xlu0 %v66, 126
  %v89 = vpop.permute.xlu0 %88
  %vm90 = vcmp.lt.s32.totalorder %v76, 126
  %v91 = vsel %vm90, %v87, %v89
  %v92 = vsel %vm90, %v85, %v87
  %v93 = vsel %vm90, %v83, %v85
  %v94 = vsel %vm90, %v89, %v83
  %95 = vrot.lane.b32.xlu0 %v63, 112
  %v96 = vpop.permute.xlu0 %95
  %97 = vrot.lane.b32.xlu0 %v64, 112
  %v98 = vpop.permute.xlu0 %97
  %99 = vrot.lane.b32.xlu0 %v65, 112
  %v100 = vpop.permute.xlu0 %99
  %101 = vrot.lane.b32.xlu0 %v66, 112
  %v102 = vpop.permute.xlu0 %101
  %vm103 = vcmp.lt.s32.totalorder %v76, 112
  %v104 = vsel %vm103, %v100, %v102
  %v105 = vsel %vm103, %v98, %v100
  %v106 = vsel %vm103, %v96, %v98
  %v107 = vsel %vm103, %v102, %v96
  %108 = vrot.lane.b32.xlu0 %v63, 111
  %v109 = vpop.permute.xlu0 %108
  %110 = vrot.lane.b32.xlu0 %v64, 111
  %v111 = vpop.permute.xlu0 %110
  %112 = vrot.lane.b32.xlu0 %v65, 111
  %v113 = vpop.permute.xlu0 %112
  %114 = vrot.lane.b32.xlu0 %v66, 111
  %v115 = vpop.permute.xlu0 %114
  %vm116 = vcmp.lt.s32.totalorder %v76, 111
  %v117 = vsel %vm116, %v113, %v115
  %v118 = vsel %vm116, %v111, %v113
  %v119 = vsel %vm116, %v109, %v111
  %v120 = vsel %vm116, %v115, %v109
  %121 = vrot.lane.b32.xlu0 %v63, 110
  %v122 = vpop.permute.xlu0 %121
  %123 = vrot.lane.b32.xlu0 %v64, 110
  %v124 = vpop.permute.xlu0 %123
  %125 = vrot.lane.b32.xlu0 %v65, 110
  %v126 = vpop.permute.xlu0 %125
  %127 = vrot.lane.b32.xlu0 %v66, 110
  %v128 = vpop.permute.xlu0 %127
  %vm129 = vcmp.lt.s32.totalorder %v76, 110
  %v130 = vsel %vm129, %v126, %v128
  %v131 = vsel %vm129, %v124, %v126
  %v132 = vsel %vm129, %v122, %v124
  %v133 = vsel %vm129, %v128, %v122
  %134 = vrot.lane.b32.xlu0 %v63, 96
  %v135 = vpop.permute.xlu0 %134
  %136 = vrot.lane.b32.xlu0 %v64, 96
  %v137 = vpop.permute.xlu0 %136
  %138 = vrot.lane.b32.xlu0 %v65, 96
  %v139 = vpop.permute.xlu0 %138
  %140 = vrot.lane.b32.xlu0 %v66, 96
  %v141 = vpop.permute.xlu0 %140
  %vm142 = vcmp.lt.s32.totalorder %v76, 96
  %v143 = vsel %vm142, %v139, %v141
  %v144 = vsel %vm142, %v137, %v139
  %v145 = vsel %vm142, %v135, %v137
  %v146 = vsel %vm142, %v141, %v135
  %147 = vrot.lane.b32.xlu0 %v63, 95
  %v148 = vpop.permute.xlu0 %147
  %149 = vrot.lane.b32.xlu0 %v64, 95
  %v150 = vpop.permute.xlu0 %149
  %151 = vrot.lane.b32.xlu0 %v65, 95
  %v152 = vpop.permute.xlu0 %151
  %153 = vrot.lane.b32.xlu0 %v66, 95
  %v154 = vpop.permute.xlu0 %153
  %vm155 = vcmp.lt.s32.totalorder %v76, 95
  %v156 = vsel %vm155, %v152, %v154
  %v157 = vsel %vm155, %v150, %v152
  %v158 = vsel %vm155, %v148, %v150
  %v159 = vsel %vm155, %v154, %v148
  %160 = vrot.lane.b32.xlu0 %v63, 94
  %v161 = vpop.permute.xlu0 %160
  %162 = vrot.lane.b32.xlu0 %v64, 94
  %v163 = vpop.permute.xlu0 %162
  %164 = vrot.lane.b32.xlu0 %v65, 94
  %v165 = vpop.permute.xlu0 %164
  %166 = vrot.lane.b32.xlu0 %v66, 94
  %v167 = vpop.permute.xlu0 %166
  %vm168 = vcmp.lt.s32.totalorder %v76, 94
  %v169 = vsel %vm168, %v165, %v167
  %v170 = vsel %vm168, %v163, %v165
  %v171 = vsel %vm168, %v161, %v163
  %v172 = vsel %vm168, %v167, %v161
  %v173 = vld [vmem:[%s1] sm:$0xff]
  %v174 = vld [vmem:[%s2] sm:$0xff]
  %176 = vset.pattern.permute.xlu0 0
  %177 = vperm.xlu0 %176, %v174
  %v178 = vpop.permute.xlu0 %177
  %vm180 = vcmask 588800
  %v182 = vsel %vm180, %v173, 0
  %184 = vmatprep.subr.mxu0 0.0
  %185 = vmatpush1.msra.mxu0 0.0
  %186 = vmatprep.subr.mxu0 0.0
  %187 = vmatpush1.msra.mxu0 0.0
  %188 = vmatprep.subr.mxu0 0.0
  %189 = vmatpush1.msra.mxu0 0.0
  %190 = vmatprep.subr.mxu0 0.0
  %191 = vmatpush1.msra.mxu0 0.0
  %192 = vmatprep.subr.mxu0 0.0
  %193 = vmatpush1.msra.mxu0 0.0
  %194 = vmatprep.subr.mxu0 0.0
  %195 = vmatpush1.msra.mxu0 0.0
  %196 = vmatprep.subr.mxu0 0.0
  %197 = vmatpush1.msra.mxu0 0.0
  %198 = vmatprep.subr.mxu0 %v170
  %199 = vmatpush1.msra.mxu0 %v171
  %200 = vmatprep.subr.mxu0 %v157
  %201 = vmatpush1.msra.mxu0 %v158
  %202 = vmatprep.subr.mxu0 %v144
  %203 = vmatpush1.msra.mxu0 %v145
  %204 = vmatprep.subr.mxu0 %v131
  %205 = vmatpush1.msra.mxu0 %v132
  %206 = vmatprep.subr.mxu0 %v118
  %207 = vmatpush1.msra.mxu0 %v119
  %208 = vmatprep.subr.mxu0 %v105
  %209 = vmatpush1.msra.mxu0 %v106
  %210 = vmatprep.subr.mxu0 %v92
  %211 = vmatpush1.msra.mxu0 %v93
  %212 = vmatprep.subr.mxu0 %v79
  %213 = vmatpush1.msra.mxu0 %v80
  %214 = vmatprep.subr.mxu0 %v64
  %215 = vmatpush1.msra.mxu0 %v63
  %216 = vmatprep.subr.mxu0 0.0
  %217 = vmatpush2.msra.mxu0 0.0
  %218 = vmatprep.subr.mxu0 0.0
  %219 = vmatpush2.msra.mxu0 0.0
  %220 = vmatprep.subr.mxu0 0.0
  %221 = vmatpush2.msra.mxu0 0.0
  %222 = vmatprep.subr.mxu0 0.0
  %223 = vmatpush2.msra.mxu0 0.0
  %224 = vmatprep.subr.mxu0 0.0
  %225 = vmatpush2.msra.mxu0 0.0
  %226 = vmatprep.subr.mxu0 0.0
  %227 = vmatpush2.msra.mxu0 0.0
  %228 = vmatprep.subr.mxu0 0.0
  %229 = vmatpush2.msra.mxu0 0.0
  %230 = vmatprep.subr.mxu0 0.0
  %231 = vmatpush2.msra.mxu0 0.0
  %232 = vmatprep.subr.mxu0 0.0
  %233 = vmatpush2.msra.mxu0 0.0
  %234 = vmatprep.subr.mxu0 0.0
  %235 = vmatpush2.msra.mxu0 0.0
  %236 = vmatprep.subr.mxu0 0.0
  %237 = vmatpush2.msra.mxu0 0.0
  %238 = vmatprep.subr.mxu0 0.0
  %239 = vmatpush2.msra.mxu0 0.0
  %240 = vmatprep.subr.mxu0 0.0
  %241 = vmatpush2.msra.mxu0 0.0
  %242 = vmatprep.subr.mxu0 0.0
  %243 = vmatpush2.msra.mxu0 0.0
  %244 = vmatprep.subr.mxu0 0.0
  %245 = vmatpush2.msra.mxu0 0.0
  %246 = vmatprep.subr.mxu0 0.0
  %247 = vmatpush2.msra.mxu0 0.0
  %248 = vmatprep.mubr.f32.mxu0 0.0
  %249 = vmatmul.mubr.f32.gmra.mxu0 %v182
  %v250 = vpop.f32.mrf.mxu0
  %v251 = vadd.f32 %v178, %v250
  %v252 = vpop.f32.mrf.mxu0
  %v253 = vadd.f32 %v178, %v252
  %254 = vdwg.mxu0
  %255 = vmatprep.subr.mxu0 0.0
  %256 = vmatpush1.msra.mxu0 0.0
  %257 = vmatprep.subr.mxu0 0.0
  %258 = vmatpush1.msra.mxu0 0.0
  %259 = vmatprep.subr.mxu0 0.0
  %260 = vmatpush1.msra.mxu0 0.0
  %261 = vmatprep.subr.mxu0 0.0
  %262 = vmatpush1.msra.mxu0 0.0
  %263 = vmatprep.subr.mxu0 0.0
  %264 = vmatpush1.msra.mxu0 0.0
  %265 = vmatprep.subr.mxu0 0.0
  %266 = vmatpush1.msra.mxu0 0.0
  %267 = vmatprep.subr.mxu0 0.0
  %268 = vmatpush1.msra.mxu0 0.0
  %269 = vmatprep.subr.mxu0 %v172
  %270 = vmatpush1.msra.mxu0 %v169
  %271 = vmatprep.subr.mxu0 %v159
  %272 = vmatpush1.msra.mxu0 %v156
  %273 = vmatprep.subr.mxu0 %v146
  %274 = vmatpush1.msra.mxu0 %v143
  %275 = vmatprep.subr.mxu0 %v133
  %276 = vmatpush1.msra.mxu0 %v130
  %277 = vmatprep.subr.mxu0 %v120
  %278 = vmatpush1.msra.mxu0 %v117
  %279 = vmatprep.subr.mxu0 %v107
  %280 = vmatpush1.msra.mxu0 %v104
  %281 = vmatprep.subr.mxu0 %v94
  %282 = vmatpush1.msra.mxu0 %v91
  %283 = vmatprep.subr.mxu0 %v81
  %284 = vmatpush1.msra.mxu0 %v78
  %285 = vmatprep.subr.mxu0 %v66
  %286 = vmatpush1.msra.mxu0 %v65
  %287 = vmatprep.subr.mxu0 0.0
  %288 = vmatpush2.msra.mxu0 0.0
  %289 = vmatprep.subr.mxu0 0.0
  %290 = vmatpush2.msra.mxu0 0.0
  %291 = vmatprep.subr.mxu0 0.0
  %292 = vmatpush2.msra.mxu0 0.0
  %293 = vmatprep.subr.mxu0 0.0
  %294 = vmatpush2.msra.mxu0 0.0
  %295 = vmatprep.subr.mxu0 0.0
  %296 = vmatpush2.msra.mxu0 0.0
  %297 = vmatprep.subr.mxu0 0.0
  %298 = vmatpush2.msra.mxu0 0.0
  %299 = vmatprep.subr.mxu0 0.0
  %300 = vmatpush2.msra.mxu0 0.0
  %301 = vmatprep.subr.mxu0 0.0
  %302 = vmatpush2.msra.mxu0 0.0
  %303 = vmatprep.subr.mxu0 0.0
  %304 = vmatpush2.msra.mxu0 0.0
  %305 = vmatprep.subr.mxu0 0.0
  %306 = vmatpush2.msra.mxu0 0.0
  %307 = vmatprep.subr.mxu0 0.0
  %308 = vmatpush2.msra.mxu0 0.0
  %309 = vmatprep.subr.mxu0 0.0
  %310 = vmatpush2.msra.mxu0 0.0
  %311 = vmatprep.subr.mxu0 0.0
  %312 = vmatpush2.msra.mxu0 0.0
  %313 = vmatprep.subr.mxu0 0.0
  %314 = vmatpush2.msra.mxu0 0.0
  %315 = vmatprep.subr.mxu0 0.0
  %316 = vmatpush2.msra.mxu0 0.0
  %317 = vmatprep.subr.mxu0 0.0
  %318 = vmatpush2.msra.mxu0 0.0
  %319 = vmatprep.mubr.f32.mxu0 0.0
  %320 = vmatmul.mubr.f32.gmra.mxu0 %v182
  %v321 = vpop.f32.mrf.mxu0
  %v322 = vadd.f32 %v178, %v321
  %v323 = vpop.f32.mrf.mxu0
  %v324 = vadd.f32 %v178, %v323
  %325 = vdwg.mxu0
  %326 = vst [vmem:[%s5] sm:$0xff] %v251
  %327 = vst [vmem:[%s5 + $0x8] sm:$0xff] %v253
  %328 = vst [vmem:[%s5 + $0x10] sm:$0xff] %v322
  %329 = vst [vmem:[%s5 + $0x18] sm:$0xff] %v324
  // Predicated region
  $region22: #{bn_then_conv.1} parent=0 // pred_check
    _
  $region23: #{bn_then_conv.1} parent=0 // pred_check_branch
    %331 = sbr.rel (0) target = $region25
  $region24: #{bn_then_conv.1} parent=0 // pred_region
    _
  $region25: #{bn_then_conv.1} parent=0 // pred_fallthru
    _
  // Predicated region
  $region26: #{bn_then_conv.1} parent=0 // pred_check
    _
  $region27: #{bn_then_conv.1} parent=0 // pred_check_branch
    %333 = sbr.rel (0) target = $region29
  $region28: #{bn_then_conv.1} parent=0 // pred_region
    _
  $region29: #{bn_then_conv.1} parent=0 // pred_fallthru
    _

</llo_original>
